<compile_context>
chip_gen: v6e
topology: v6e:2x2x1
jax: 0.10.0
libtpu: 0.0.40
codegen_flags: <defaults>
</compile_context>

<pallas_src>
import math
import numpy as np
import jax
import jax.numpy as jnp
from jax.experimental import pallas as pl
from jax.experimental.pallas import tpu as pltpu

# Module defaults: channels=1, kernel_size=5, sigma=0.5, dim=3
CHANNELS = 1
KERNEL_SIZE = 5
SIGMA = 0.5
DIM = 3
PAD = KERNEL_SIZE // 2


def _gaussian_kernel_1d(kernel_size=KERNEL_SIZE, sigma=SIGMA):
    """Normalized 1D taps; the reference 3D kernel == outer(w1, w1, w1).

    Note: exp(-((k-mean)/(2*sigma))**2) (effective sigma = sigma*sqrt(2)) is a
    faithful reproduction of the PyTorch module, not a kernel bug.
    """
    k = np.arange(kernel_size, dtype=np.float64)
    mean = (kernel_size - 1) / 2.0
    g = (1.0 / (sigma * math.sqrt(2.0 * math.pi))
         * np.exp(-(((k - mean) / (2.0 * sigma)) ** 2)))
    return g / g.sum()


def _gaussian_kernel_3d(kernel_size=KERNEL_SIZE, sigma=SIGMA, dim=DIM):
    """Faithful reproduction of GaussianSmoothing.__init__ (host reference)."""
    ks = [kernel_size] * dim
    sg = [sigma] * dim
    grids = np.meshgrid(*[np.arange(s, dtype=np.float32) for s in ks],
                        indexing="ij")
    kernel = np.ones((), dtype=np.float32)
    for size, std, mg in zip(ks, sg, grids):
        mean = (size - 1) / 2.0
        kernel = kernel * (1.0 / (std * math.sqrt(2.0 * math.pi))
                           * np.exp(-(((mg - mean) / (2.0 * std)) ** 2)))
    return (kernel / kernel.sum()).astype(np.float32)


def _band_matrix(n, w1):
    """(n, n) matrix B with y = x @ B == 1D 5-tap 'same' conv along an axis."""
    b = np.zeros((n, n), dtype=np.float32)
    for i_out in range(n):
        for o in range(-PAD, PAD + 1):
            i_in = i_out + o
            if 0 <= i_in < n:
                b[i_in, i_out] = w1[o + PAD]
    return b


def _build_hw_matrix(H, W, HW_pad, w1):
    """Fused H+W pass as one banded (HW_pad, HW_pad) matrix (kron of bands)."""
    m = np.kron(_band_matrix(H, w1), _band_matrix(W, w1)).astype(np.float32)
    if HW_pad != H * W:
        mp = np.zeros((HW_pad, HW_pad), dtype=np.float32)
        mp[:H * W, :H * W] = m
        m = mp
    return m


def _d_pass(y, D, block_rows, wc):
    """5-tap depth pass via sublane rolls; boundary folded into weights."""
    d_idx = jax.lax.broadcasted_iota(jnp.int32, (block_rows, 1), 0) % D
    acc = wc[PAD] * y
    for o in range(-PAD, PAD + 1):
        if o == 0:
            continue
        rolled = pltpu.roll(y, shift=(-o) % block_rows, axis=0)
        valid = (d_idx >= -o) if o < 0 else (d_idx < D - o)
        wvec = jnp.where(valid, jnp.float32(wc[o + PAD]), jnp.float32(0.0))
        acc = acc + rolled * wvec
    return acc


def _make_kernel_mxu(D, block_rows, w1_np):
    """MXU path: fused H+W banded matmul, then D pass on VPU/XLU."""
    wc = [float(v) for v in w1_np]

    def kernel(x_ref, m_ref, o_ref):
        x = x_ref[...].astype(jnp.float32)
        # --- H + W passes fused into one banded matmul on the MXU ---
        y = jnp.dot(x, m_ref[...], preferred_element_type=jnp.float32)
        # --- D pass: 5 sublane rolls, weights carry the boundary mask ---
        acc = _d_pass(y, D, block_rows, wc)
        o_ref[...] = acc.astype(o_ref.dtype)     # single lane-dense store

    return kernel


def _make_kernel_rolls(D, H, W, HW_pad, block_rows, w1_np):
    """Fallback (very large H*W): lane rolls with folded (1, HW) weights."""
    wc = [float(v) for v in w1_np]
    offs = [o for o in range(-PAD, PAD + 1) if o != 0]

    def kernel(x_ref, o_ref):
        x = x_ref[...].astype(jnp.float32)
        lane = jax.lax.broadcasted_iota(jnp.int32, (1, HW_pad), 1)
        w_idx = lane % W
        h_idx = lane // W

        # W pass: 5 taps along lanes, boundary folded into (1, HW) weights.
        acc = wc[PAD] * x
        for o in offs:
            shifted = pltpu.roll(x, shift=(-o) % HW_pad, axis=1)
            valid = (w_idx >= -o) if o < 0 else (w_idx < W - o)
            acc = acc + shifted * jnp.where(valid, jnp.float32(wc[o + PAD]),
                                            jnp.float32(0.0))
        y = acc

        # H pass: 5 taps along lanes with stride W.
        acc = wc[PAD] * y
        for o in offs:
            shifted = pltpu.roll(y, shift=(-o * W) % HW_pad, axis=1)
            valid = (h_idx >= -o) if o < 0 else (h_idx < H - o)
            acc = acc + shifted * jnp.where(valid, jnp.float32(wc[o + PAD]),
                                            jnp.float32(0.0))
        y = acc

        # D pass: sublane rolls.
        acc = _d_pass(y, D, block_rows, wc)
        o_ref[...] = acc.astype(o_ref.dtype)

    return kernel


def _pick_block_b(B, D, HW_pad, itemsize):
    """Volumes per grid step: divides B, rows % 8 == 0, fits a VMEM budget,
    and keeps >= 2 grid steps when possible (v7x megacore / pipelining)."""
    bytes_per_row = HW_pad * (4 * itemsize + 3 * 4)   # 2x in + 2x out + f32 tmps
    budget = 16 << 20                                  # conservative across gens
    max_rows = max(8, budget // max(bytes_per_row, 1))

    legal = [b for b in range(1, B + 1) if B % b == 0 and (b * D) % 8 == 0]
    fitting = [b for b in legal if b * D <= max_rows]
    if fitting:
        multi = [b for b in fitting if B // b >= 2]
        return max(multi) if multi else max(fitting)
    if legal:
        # TODO(synk): D-halo tiling (second grid axis over D with 2*PAD halo)
        # for single volumes too large for the VMEM budget (e.g. 128^3 on v7x).
        return min(legal)
    return B   # full-extent block (block_shape == array shape) is always legal


def gaussian_smoothing(x):
    """Depthwise 5x5x5 gaussian smoothing of an NCDHW tensor ('same' padding)."""
    N, C, D, H, W = x.shape
    B, HW = N * C, H * W
    HW_pad = -(-HW // 128) * 128                    # lane-dense output stores
    itemsize = x.dtype.itemsize

    block_b = _pick_block_b(B, D, HW_pad, itemsize)
    block_rows = block_b * D
    nb = B // block_b

    x2 = x.reshape(B * D, HW)
    if HW_pad != HW:
        x2 = jnp.pad(x2, ((0, 0), (0, HW_pad - HW)))

    w1 = _gaussian_kernel_1d()
    use_mxu = (HW_pad * HW_pad * 4) <= (8 << 20)    # banded matrix fits VMEM

    # Explicit scoped-VMEM limit instead of the 16/32 MiB defaults.
    est = (4 * block_rows * HW_pad * itemsize       # double-buffered in + out
           + 3 * block_rows * HW_pad * 4)           # f32 temporaries
    if use_mxu:
        est += 2 * HW_pad * HW_pad * 4
    vmem_limit = int(min(100 << 20, max(32 << 20, 2 * est)))

    out_shape = jax.ShapeDtypeStruct((B * D, HW_pad), x.dtype)
    cparams = pltpu.CompilerParams(
        dimension_semantics=("parallel",),
        vmem_limit_bytes=vmem_limit)

    if use_mxu:
        m = jnp.asarray(_build_hw_matrix(H, W, HW_pad, w1))
        out2 = pl.pallas_call(
            _make_kernel_mxu(D, block_rows, w1),
            out_shape=out_shape,
            grid=(nb,),
            in_specs=[pl.BlockSpec((block_rows, HW_pad), lambda b: (b, 0)),
                      pl.BlockSpec((HW_pad, HW_pad), lambda b: (0, 0))],
            out_specs=pl.BlockSpec((block_rows, HW_pad), lambda b: (b, 0)),
            compiler_params=cparams,
        )(x2, m)
    else:
        out2 = pl.pallas_call(
            _make_kernel_rolls(D, H, W, HW_pad, block_rows, w1),
            out_shape=out_shape,
            grid=(nb,),
            in_specs=[pl.BlockSpec((block_rows, HW_pad), lambda b: (b, 0))],
            out_specs=pl.BlockSpec((block_rows, HW_pad), lambda b: (b, 0)),
            compiler_params=cparams,
        )(x2)

    if HW_pad != HW:
        out2 = out2[:, :HW]
    return out2.reshape(N, C, D, H, W)


if __name__ == "__main__":
    key = jax.random.PRNGKey(0)
    N, C, D, H, W = 2, CHANNELS, 8, 16, 16
    x = jax.random.normal(key, (N, C, D, H, W), dtype=jnp.float32)

    y = jax.block_until_ready(gaussian_smoothing(x))

    # Host reference: direct 125-tap depthwise conv3d (groups=C, padding=2).
    xn = np.asarray(x, dtype=np.float64)
    w3 = _gaussian_kernel_3d().astype(np.float64)
    xpad = np.pad(xn, ((0, 0), (0, 0), (PAD, PAD), (PAD, PAD), (PAD, PAD)))
    ref = np.zeros_like(xn)
    for kd in range(KERNEL_SIZE):
        for kh in range(KERNEL_SIZE):
            for kw in range(KERNEL_SIZE):
                ref += w3[kd, kh, kw] * xpad[:, :, kd:kd + D, kh:kh + H, kw:kw + W]

    err = np.max(np.abs(np.asarray(y, dtype=np.float64) - ref))
    assert np.allclose(np.asarray(y), ref, rtol=1e-4, atol=1e-4), (
        "mismatch: max abs err = %g" % err)
    print("KERNEL_OK")
</pallas_src>

<mosaic_0001>
module attributes {stable_mosaic.version = 11 : i64} {
  func.func @kernel(%arg0: i32, %arg1: memref<8x256xf32, #tpu.memory_space<vmem>>, %arg2: memref<256x256xf32, #tpu.memory_space<vmem>>, %arg3: memref<8x256xf32, #tpu.memory_space<vmem>>) attributes {dimension_semantics = [#tpu.dimension_semantics<parallel>], iteration_bounds = array<i64: 2>, scalar_prefetch = 0 : i64, scratch_operands = 0 : i64, tpu.core_type = #tpu.core_type<tc>, window_params = [{transform_indices = @transform_0, window_bounds = array<i64: 8, 256>}, {pipeline_mode = #tpu.pipeline_mode<synchronous>, transform_indices = @transform_1, window_bounds = array<i64: 256, 256>}, {transform_indices = @transform_2, window_bounds = array<i64: 8, 256>}]} {
    %c0 = arith.constant 0 : index
    %c0_0 = arith.constant 0 : index
    %0 = vector.load %arg1[%c0, %c0_0] : memref<8x256xf32, #tpu.memory_space<vmem>>, vector<8x256xf32>
    %c0_1 = arith.constant 0 : index
    %c0_2 = arith.constant 0 : index
    %1 = vector.load %arg2[%c0_1, %c0_2] : memref<256x256xf32, #tpu.memory_space<vmem>>, vector<256x256xf32>
    %cst = arith.constant dense<0.000000e+00> : vector<8x256xf32>
    %2 = tpu.matmul %0, %1, %cst {dimension_numbers = #tpu.dot_dimension_numbers<[1], [0], [0], [1], [0, 0, 1, 1], [], []>} : vector<8x256xf32>, vector<256x256xf32>, vector<8x256xf32> -> vector<8x256xf32>
    %3 = tpu.iota {dimensions = array<i32: 0>} : vector<8x1xi32>
    %c8_i32 = arith.constant 8 : i32
    %c0_i32 = arith.constant 0 : i32
    %4 = arith.cmpi eq, %c8_i32, %c0_i32 : i32
    %c1_i32 = arith.constant 1 : i32
    %5 = arith.select %4, %c1_i32, %c8_i32 : i32
    %6 = vector.broadcast %5 : i32 to vector<8x1xi32>
    %7 = arith.remsi %3, %6 : vector<8x1xi32>
    %c0_i32_3 = arith.constant 0 : i32
    %8 = vector.broadcast %c0_i32_3 : i32 to vector<8x1xi32>
    %9 = arith.cmpi ne, %7, %8 : vector<8x1xi32>
    %c0_i32_4 = arith.constant 0 : i32
    %10 = vector.broadcast %c0_i32_4 : i32 to vector<8x1xi32>
    %11 = arith.cmpi slt, %7, %10 : vector<8x1xi32>
    %c0_i32_5 = arith.constant 0 : i32
    %12 = arith.cmpi slt, %5, %c0_i32_5 : i32
    %13 = vector.broadcast %12 : i1 to vector<8x1xi1>
    %14 = vector.broadcast %13 : vector<8x1xi1> to vector<8x1xi1>
    %15 = arith.xori %11, %14 : vector<8x1xi1>
    %16 = arith.andi %15, %9 : vector<8x1xi1>
    %17 = vector.broadcast %5 : i32 to vector<8x1xi32>
    %18 = arith.addi %7, %17 : vector<8x1xi32>
    %19 = arith.select %16, %18, %7 : vector<8x1xi1>, vector<8x1xi32>
    %cst_6 = arith.constant 0.564209878 : f32
    %20 = vector.broadcast %cst_6 : f32 to vector<8x256xf32>
    %21 = arith.mulf %20, %2 : vector<8x256xf32>
    %c2_i32 = arith.constant 2 : i32
    %22 = tpu.dynamic_rotate %2 by %c2_i32 dim 0 : vector<8x256xf32>, i32 -> vector<8x256xf32>
    %c2_i32_7 = arith.constant 2 : i32
    %23 = vector.broadcast %c2_i32_7 : i32 to vector<8x1xi32>
    %24 = arith.cmpi sge, %19, %23 : vector<8x1xi32>
    %cst_8 = arith.constant 0.010333864 : f32
    %cst_9 = arith.constant 0.000000e+00 : f32
    %25 = vector.broadcast %cst_8 : f32 to vector<8x1xf32>
    %26 = vector.broadcast %cst_9 : f32 to vector<8x1xf32>
    %27 = arith.select %24, %25, %26 : vector<8x1xi1>, vector<8x1xf32>
    %28 = vector.broadcast %27 : vector<8x1xf32> to vector<8x256xf32>
    %29 = arith.mulf %22, %28 : vector<8x256xf32>
    %30 = arith.addf %21, %29 : vector<8x256xf32>
    %c1_i32_10 = arith.constant 1 : i32
    %31 = tpu.dynamic_rotate %2 by %c1_i32_10 dim 0 : vector<8x256xf32>, i32 -> vector<8x256xf32>
    %c1_i32_11 = arith.constant 1 : i32
    %32 = vector.broadcast %c1_i32_11 : i32 to vector<8x1xi32>
    %33 = arith.cmpi sge, %19, %32 : vector<8x1xi32>
    %cst_12 = arith.constant 0.20756121 : f32
    %cst_13 = arith.constant 0.000000e+00 : f32
    %34 = vector.broadcast %cst_12 : f32 to vector<8x1xf32>
    %35 = vector.broadcast %cst_13 : f32 to vector<8x1xf32>
    %36 = arith.select %33, %34, %35 : vector<8x1xi1>, vector<8x1xf32>
    %37 = vector.broadcast %36 : vector<8x1xf32> to vector<8x256xf32>
    %38 = arith.mulf %31, %37 : vector<8x256xf32>
    %39 = arith.addf %30, %38 : vector<8x256xf32>
    %c7_i32 = arith.constant 7 : i32
    %40 = tpu.dynamic_rotate %2 by %c7_i32 dim 0 : vector<8x256xf32>, i32 -> vector<8x256xf32>
    %c7_i32_14 = arith.constant 7 : i32
    %41 = vector.broadcast %c7_i32_14 : i32 to vector<8x1xi32>
    %42 = arith.cmpi slt, %19, %41 : vector<8x1xi32>
    %cst_15 = arith.constant 0.20756121 : f32
    %cst_16 = arith.constant 0.000000e+00 : f32
    %43 = vector.broadcast %cst_15 : f32 to vector<8x1xf32>
    %44 = vector.broadcast %cst_16 : f32 to vector<8x1xf32>
    %45 = arith.select %42, %43, %44 : vector<8x1xi1>, vector<8x1xf32>
    %46 = vector.broadcast %45 : vector<8x1xf32> to vector<8x256xf32>
    %47 = arith.mulf %40, %46 : vector<8x256xf32>
    %48 = arith.addf %39, %47 : vector<8x256xf32>
    %c6_i32 = arith.constant 6 : i32
    %49 = tpu.dynamic_rotate %2 by %c6_i32 dim 0 : vector<8x256xf32>, i32 -> vector<8x256xf32>
    %c6_i32_17 = arith.constant 6 : i32
    %50 = vector.broadcast %c6_i32_17 : i32 to vector<8x1xi32>
    %51 = arith.cmpi slt, %19, %50 : vector<8x1xi32>
    %cst_18 = arith.constant 0.010333864 : f32
    %cst_19 = arith.constant 0.000000e+00 : f32
    %52 = vector.broadcast %cst_18 : f32 to vector<8x1xf32>
    %53 = vector.broadcast %cst_19 : f32 to vector<8x1xf32>
    %54 = arith.select %51, %52, %53 : vector<8x1xi1>, vector<8x1xf32>
    %55 = vector.broadcast %54 : vector<8x1xf32> to vector<8x256xf32>
    %56 = arith.mulf %49, %55 : vector<8x256xf32>
    %57 = arith.addf %48, %56 : vector<8x256xf32>
    %c0_20 = arith.constant 0 : index
    %c0_21 = arith.constant 0 : index
    %58 = vector.load %arg3[%c0_20, %c0_21] : memref<8x256xf32, #tpu.memory_space<vmem>>, vector<8x256xf32>
    tpu.vector_store %arg3[%c0_20, %c0_21], %57 {strides = array<i32>} : memref<8x256xf32, #tpu.memory_space<vmem>>, vector<8x256xf32>,
    return
  }
  func.func @transform_0(%arg0: i32) -> (i32, i32) {
    %c0_i32 = arith.constant 0 : i32
    %c0_i32_0 = arith.constant 0 : i32
    return %arg0, %c0_i32 : i32, i32
  }
  func.func @transform_1(%arg0: i32) -> (i32, i32) {
    %c0_i32 = arith.constant 0 : i32
    %c0_i32_0 = arith.constant 0 : i32
    %c0_i32_1 = arith.constant 0 : i32
    return %c0_i32, %c0_i32_0 : i32, i32
  }
  func.func @transform_2(%arg0: i32) -> (i32, i32) {
    %c0_i32 = arith.constant 0 : i32
    %c0_i32_0 = arith.constant 0 : i32
    return %arg0, %c0_i32 : i32, i32
  }
}

</mosaic_0001>

<llo_original>
// kernel: tpu_custom_call.1
$region0: #{tpu_custom_call.1}
  #allocation0 [shape = 'u32[]', space=smem, size = 0x4, offset = 0x4, fixed_abs, tag = 'smem constant byte address 0x4 - core index']
  #allocation1 [shape = 'u32[144,128]{1,0:T(1,128)}', space=vmem, size = 0x12000, scoped, tag = 'internal scratch']
  %s0 = inlined_call_operand.hbm [shape: f32[16,256], index: 0, kind: input, shape index: {}]
  %s1 = inlined_call_operand.hbm [shape: f32[256,256], index: 1, kind: input, shape index: {}]
  %s2 = inlined_call_operand.hbm [shape: f32[16,256], index: 2, kind: output, shape index: {}]
  %s3 = sld [smem:[#allocation0]]
  $region49: #{tpu_custom_call.1} parent=0
    _
  %s5 = ssub.s32 1, %s3
  %s6 = scalar_select 0, %s5, %s3
  $region1: #{tpu_custom_call.1} parent=0
    #allocation2 [shape = 'u8[16384]{0}', space=vmem, size = 0x4000, scoped, tag = 'input window, operand 0']
    #allocation3 [shape = 's32[2]{0}', space=sflag, size = 0x8, scoped, tag = 'scoped memory for tpu_custom_call.1']
    #allocation4 [shape = 's32[2]{0}', space=sflag, size = 0x8, scoped, tag = 'scoped memory for tpu_custom_call.1']
    #allocation5 [shape = 'u8[262144]{0}', space=vmem, size = 0x40000, scoped, tag = 'input window, operand 1, single buffered']
    #allocation6 [shape = 's32[1]{0}', space=sflag, size = 0x4, scoped, tag = 'scoped memory for tpu_custom_call.1']
    #allocation7 [shape = 'u8[16384]{0}', space=vmem, size = 0x4000, scoped, tag = 'output window, operand 0']
    %7 = vsyncpa [#allocation3], 0
    %s8 = scalar_lea.sflag [#allocation3], 1
    %9 = vsyncpa %s8, 0
    %10 = vsyncpa [#allocation6], 0
    %11 = vsyncpa [#allocation4], 0
    %s12 = scalar_lea.sflag [#allocation4], 1
    %13 = vsyncpa %s12, 0
    loop: start=0, step=1, limit=4
    $region2: #{tpu_custom_call.1} parent=1 // loop_pre_header
      _
    $region3: #{tpu_custom_call.1} parent=1 // loop_header
      %s15 = sphi 0, %s19
      %p16 = scmp.ge.s32.totalorder %s15, 4
      %s25 = sphi 0, %s27
      %s28 = sphi 0, %s25
      %s29 = sphi 0, %s28
      %s45 = sphi 0, %s29
      %s49 = sphi 0, %s49
      %s51 = sphi 0, %s49
      %s52 = sphi 0, %s51
      %s66 = sphi 0, %s52
      %s72 = sphi 0, %s74
      %s75 = sphi 0, %s72
      %s76 = sphi 0, %s75
      %s92 = sphi 0, %s76
    $region4: #{tpu_custom_call.1} parent=1 // loop_header_branch
      %18 = sbr.rel (%p16) target = $region8
    $region5: #{tpu_custom_call.1} parent=1 // loop_body
      %s20 = ssub.s32 %s15, 1
      %s21 = ssub.s32 %s15, 2
      %s22 = sadd.s32 %s15, 1
      %s23 = ssub.s32 %s15, %s22
      %p24 = scmp.eq.s32.totalorder %s23, 0
      %s26 = sadd.s32 %s25, 1
      %s27 = scalar_select %p24, %s25, %s26
      %p30 = pneg %p24
      %p31 = scmp.eq.s32.totalorder %s15, 1
      %p32 = por %p30, %p31
      %p33 = scmp.ne.s32.totalorder %s25, %s28
      %p34 = scmp.eq.s32.totalorder %s15, 0
      %p35 = por %p33, %p34
      %p36 = scmp.ne.s32.totalorder %s25, %s28
      %p37 = scmp.eq.s32.totalorder %s20, 1
      %p38 = por %p36, %p37
      %p39 = scmp.ne.s32.totalorder %s28, %s29
      %p40 = scmp.eq.s32.totalorder %s20, 0
      %p41 = por %p39, %p40
      %p42 = scmp.ne.s32.totalorder %s28, %s29
      %p43 = scmp.eq.s32.totalorder %s21, 1
      %p44 = por %p42, %p43
      %p46 = scmp.ne.s32.totalorder %s29, %s45
      %p47 = scmp.eq.s32.totalorder %s21, 0
      %p48 = por %p46, %p47
      %s50 = sadd.s32 %s49, 1
      %p53 = scmp.eq.s32.totalorder %s15, 1
      %p54 = scmp.ne.s32.totalorder %s49, %s51
      %p55 = scmp.eq.s32.totalorder %s15, 0
      %p56 = por %p54, %p55
      %p57 = scmp.ne.s32.totalorder %s49, %s51
      %p58 = scmp.eq.s32.totalorder %s20, 1
      %p59 = por %p57, %p58
      %p60 = scmp.ne.s32.totalorder %s51, %s52
      %p61 = scmp.eq.s32.totalorder %s20, 0
      %p62 = por %p60, %p61
      %p63 = scmp.ne.s32.totalorder %s51, %s52
      %p64 = scmp.eq.s32.totalorder %s21, 1
      %p65 = por %p63, %p64
      %p67 = scmp.ne.s32.totalorder %s52, %s66
      %p68 = scmp.eq.s32.totalorder %s21, 0
      %p69 = por %p67, %p68
      %s70 = ssub.s32 %s15, %s22
      %p71 = scmp.eq.s32.totalorder %s70, 0
      %s73 = sadd.s32 %s72, 1
      %s74 = scalar_select %p71, %s72, %s73
      %p77 = pneg %p71
      %p78 = scmp.eq.s32.totalorder %s15, 1
      %p79 = por %p77, %p78
      %p80 = scmp.ne.s32.totalorder %s72, %s75
      %p81 = scmp.eq.s32.totalorder %s15, 0
      %p82 = por %p80, %p81
      %p83 = scmp.ne.s32.totalorder %s72, %s75
      %p84 = scmp.eq.s32.totalorder %s20, 1
      %p85 = por %p83, %p84
      %p86 = scmp.ne.s32.totalorder %s75, %s76
      %p87 = scmp.eq.s32.totalorder %s20, 0
      %p88 = por %p86, %p87
      %p89 = scmp.ne.s32.totalorder %s75, %s76
      %p90 = scmp.eq.s32.totalorder %s21, 1
      %p91 = por %p89, %p90
      %p93 = scmp.ne.s32.totalorder %s76, %s92
      %p94 = scmp.eq.s32.totalorder %s21, 0
      %p95 = por %p93, %p94
      %p96 = scmp.le.s32.totalorder 1, %s15
      %p97 = scmp.lt.s32.totalorder %s15, 3
      %p98 = pnand %p96, %p97
      %p99 = pneg %p98
      // Predicated region
      $region9: #{tpu_custom_call.1} parent=5 // pred_check
        _
      $region10: #{tpu_custom_call.1} parent=5 // pred_check_branch
        %101 = sbr.rel (%p98) target = $region12
      $region11: #{tpu_custom_call.1} parent=5 // pred_region
        %s102 = ssub.s32 %s15, 1
        // Predicated region
        $region13: #{tpu_custom_call.1} parent=11 // pred_check
          %p103 = pneg %p62
        $region14: #{tpu_custom_call.1} parent=11 // pred_check_branch
          %105 = sbr.rel (%p103) target = $region16
        $region15: #{tpu_custom_call.1} parent=11 // pred_region
          %s107 = ssub.s32 8192, 8192
          %108 = vsyncadd [#allocation6], %s107
          %s109 = sshll.u32 [#allocation5], 4
          %s110 = int_to_ptr.vmem [resolvable:$true] %s109
          %115 = dma.hbm_to_vmem [thread:$0]  %s1, 8192, %s110, [#allocation6], 256, 256, 16
        $region16: #{tpu_custom_call.1} parent=11 // pred_fallthru
          _
      $region12: #{tpu_custom_call.1} parent=5 // pred_fallthru
        _
      %p116 = scmp.lt.s32.totalorder %s15, 2
      // Predicated region
      $region17: #{tpu_custom_call.1} parent=5 // pred_check
        %p117 = pneg %p116
      $region18: #{tpu_custom_call.1} parent=5 // pred_check_branch
        %119 = sbr.rel (%p117) target = $region20
      $region19: #{tpu_custom_call.1} parent=5 // pred_region
        // Predicated region
        $region21: #{tpu_custom_call.1} parent=19 // pred_check
          %p120 = pneg %p35
        $region22: #{tpu_custom_call.1} parent=19 // pred_check_branch
          %122 = sbr.rel (%p120) target = $region24
        $region23: #{tpu_custom_call.1} parent=19 // pred_region
          %s123 = sand.u32 %s25, 1
          %s124 = scalar_lea.sflag [#allocation3], %s123
          %s125 = sand.u32 %s25, 1
          %s126 = smul.addr %s125, 16
          %s127 = scalar_lea.vmem [#allocation2], %s126
          %s129 = ssub.s32 256, 256
          %130 = vsyncadd %s124, %s129
          %s131 = smul.addr %s15, 2
          %s132 = smul.addr %s131, 128
          %s133 = scalar_lea.hbm %s0, %s132
          %s135 = sshll.u32 %s127, 4
          %s136 = int_to_ptr.vmem [resolvable:$true] %s135
          %138 = dma.hbm_to_vmem [thread:$0]  %s133, 256, %s136, %s124
        $region24: #{tpu_custom_call.1} parent=19 // pred_fallthru
          _
      $region20: #{tpu_custom_call.1} parent=5 // pred_fallthru
        _
      %p139 = scmp.le.s32.totalorder 1, %s15
      %p140 = scmp.lt.s32.totalorder %s15, 3
      %p141 = pnand %p139, %p140
      %p142 = pneg %p141
      // Predicated region
      $region25: #{tpu_custom_call.1} parent=5 // pred_check
        _
      $region26: #{tpu_custom_call.1} parent=5 // pred_check_branch
        %144 = sbr.rel (%p141) target = $region28
      $region27: #{tpu_custom_call.1} parent=5 // pred_region
        %s145 = ssub.s32 %s15, 1
        %s146 = sand.u32 %s28, 1
        %s147 = scalar_lea.sflag [#allocation3], %s146
        %s148 = sand.u32 %s28, 1
        %s149 = smul.addr %s148, 16
        %s150 = scalar_lea.vmem [#allocation2], %s149
        // Predicated region
        $region29: #{tpu_custom_call.1} parent=27 // pred_check
          %p151 = pneg %p41
        $region30: #{tpu_custom_call.1} parent=27 // pred_check_branch
          %153 = sbr.rel (%p151) target = $region32
        $region31: #{tpu_custom_call.1} parent=27 // pred_region
          %154 = dma.done %s147, 256
        $region32: #{tpu_custom_call.1} parent=27 // pred_fallthru
          _
        // Predicated region
        $region33: #{tpu_custom_call.1} parent=27 // pred_check
          %p155 = pneg %p62
        $region34: #{tpu_custom_call.1} parent=27 // pred_check_branch
          %157 = sbr.rel (%p155) target = $region36
        $region35: #{tpu_custom_call.1} parent=27 // pred_region
          %158 = dma.done [#allocation6], 8192
        $region36: #{tpu_custom_call.1} parent=27 // pred_fallthru
          _
        %s159 = sand.u32 %s28, 1
        %s160 = scalar_lea.sflag [#allocation3], %s159
        %s161 = sand.u32 %s28, 1
        %s162 = smul.addr %s161, 16
        %s163 = scalar_lea.vmem [#allocation2], %s162
        %p164 = pneg %p41
        %p165 = pneg %p38
        %p166 = pneg %p62
        %p167 = pneg %p59
        %p168 = pneg %p88
        %p169 = pneg %p85
        %s170 = sand.u32 %s75, 1
        %s171 = scalar_lea.sflag [#allocation4], %s170
        %s172 = sand.u32 %s75, 1
        %s173 = smul.addr %s172, 16
        %s174 = scalar_lea.vmem [#allocation7], %s173
        %v175 = vld [vmem:[%s150] sm:$0xff]
        %v176 = vld [vmem:[%s150 + $0x8] sm:$0xff]
        %v177 = vld [vmem:[#allocation5] sm:$0xff]
        %v178 = vld [vmem:[#allocation5 + $0x8] sm:$0xff]
        %v179 = vld [vmem:[#allocation5 + $0x10] sm:$0xff]
        %v180 = vld [vmem:[#allocation5 + $0x18] sm:$0xff]
        %v181 = vld [vmem:[#allocation5 + $0x20] sm:$0xff]
        %v182 = vld [vmem:[#allocation5 + $0x28] sm:$0xff]
        %v183 = vld [vmem:[#allocation5 + $0x30] sm:$0xff]
        %v184 = vld [vmem:[#allocation5 + $0x38] sm:$0xff]
        %v185 = vld [vmem:[#allocation5 + $0x40] sm:$0xff]
        %v186 = vld [vmem:[#allocation5 + $0x48] sm:$0xff]
        %v187 = vld [vmem:[#allocation5 + $0x50] sm:$0xff]
        %v188 = vld [vmem:[#allocation5 + $0x58] sm:$0xff]
        %v189 = vld [vmem:[#allocation5 + $0x60] sm:$0xff]
        %v190 = vld [vmem:[#allocation5 + $0x68] sm:$0xff]
        %v191 = vld [vmem:[#allocation5 + $0x70] sm:$0xff]
        %v192 = vld [vmem:[#allocation5 + $0x78] sm:$0xff]
        %v193 = vld [vmem:[#allocation5 + $0x80] sm:$0xff]
        %v194 = vld [vmem:[#allocation5 + $0x88] sm:$0xff]
        %v195 = vld [vmem:[#allocation5 + $0x90] sm:$0xff]
        %v196 = vld [vmem:[#allocation5 + $0x98] sm:$0xff]
        %v197 = vld [vmem:[#allocation5 + $0xa0] sm:$0xff]
        %v198 = vld [vmem:[#allocation5 + $0xa8] sm:$0xff]
        %v199 = vld [vmem:[#allocation5 + $0xb0] sm:$0xff]
        %v200 = vld [vmem:[#allocation5 + $0xb8] sm:$0xff]
        %v201 = vld [vmem:[#allocation5 + $0xc0] sm:$0xff]
        %v202 = vld [vmem:[#allocation5 + $0xc8] sm:$0xff]
        %v203 = vld [vmem:[#allocation5 + $0xd0] sm:$0xff]
        %v204 = vld [vmem:[#allocation5 + $0xd8] sm:$0xff]
        %v205 = vld [vmem:[#allocation5 + $0xe0] sm:$0xff]
        %v206 = vld [vmem:[#allocation5 + $0xe8] sm:$0xff]
        %v207 = vld [vmem:[#allocation5 + $0xf0] sm:$0xff]
        %v208 = vld [vmem:[#allocation5 + $0xf8] sm:$0xff]
        %v209 = vld [vmem:[#allocation5 + $0x100] sm:$0xff]
        %v210 = vld [vmem:[#allocation5 + $0x108] sm:$0xff]
        %v211 = vld [vmem:[#allocation5 + $0x110] sm:$0xff]
        %v212 = vld [vmem:[#allocation5 + $0x118] sm:$0xff]
        %v213 = vld [vmem:[#allocation5 + $0x120] sm:$0xff]
        %v214 = vld [vmem:[#allocation5 + $0x128] sm:$0xff]
        %v215 = vld [vmem:[#allocation5 + $0x130] sm:$0xff]
        %v216 = vld [vmem:[#allocation5 + $0x138] sm:$0xff]
        %v217 = vld [vmem:[#allocation5 + $0x140] sm:$0xff]
        %v218 = vld [vmem:[#allocation5 + $0x148] sm:$0xff]
        %v219 = vld [vmem:[#allocation5 + $0x150] sm:$0xff]
        %v220 = vld [vmem:[#allocation5 + $0x158] sm:$0xff]
        %v221 = vld [vmem:[#allocation5 + $0x160] sm:$0xff]
        %v222 = vld [vmem:[#allocation5 + $0x168] sm:$0xff]
        %v223 = vld [vmem:[#allocation5 + $0x170] sm:$0xff]
        %v224 = vld [vmem:[#allocation5 + $0x178] sm:$0xff]
        %v225 = vld [vmem:[#allocation5 + $0x180] sm:$0xff]
        %v226 = vld [vmem:[#allocation5 + $0x188] sm:$0xff]
        %v227 = vld [vmem:[#allocation5 + $0x190] sm:$0xff]
        %v228 = vld [vmem:[#allocation5 + $0x198] sm:$0xff]
        %v229 = vld [vmem:[#allocation5 + $0x1a0] sm:$0xff]
        %v230 = vld [vmem:[#allocation5 + $0x1a8] sm:$0xff]
        %v231 = vld [vmem:[#allocation5 + $0x1b0] sm:$0xff]
        %v232 = vld [vmem:[#allocation5 + $0x1b8] sm:$0xff]
        %v233 = vld [vmem:[#allocation5 + $0x1c0] sm:$0xff]
        %v234 = vld [vmem:[#allocation5 + $0x1c8] sm:$0xff]
        %v235 = vld [vmem:[#allocation5 + $0x1d0] sm:$0xff]
        %v236 = vld [vmem:[#allocation5 + $0x1d8] sm:$0xff]
        %v237 = vld [vmem:[#allocation5 + $0x1e0] sm:$0xff]
        %v238 = vld [vmem:[#allocation5 + $0x1e8] sm:$0xff]
        %v239 = vld [vmem:[#allocation5 + $0x1f0] sm:$0xff]
        %v240 = vld [vmem:[#allocation5 + $0x1f8] sm:$0xff]
        %241 = vmatprep.subr.mxu0 %v208
        %242 = vmatpush1.msra.mxu0 %v207
        %243 = vmatprep.subr.mxu0 %v206
        %244 = vmatpush1.msra.mxu0 %v205
        %245 = vmatprep.subr.mxu0 %v204
        %246 = vmatpush1.msra.mxu0 %v203
        %247 = vmatprep.subr.mxu0 %v202
        %248 = vmatpush1.msra.mxu0 %v201
        %249 = vmatprep.subr.mxu0 %v200
        %250 = vmatpush1.msra.mxu0 %v199
        %251 = vmatprep.subr.mxu0 %v198
        %252 = vmatpush1.msra.mxu0 %v197
        %253 = vmatprep.subr.mxu0 %v196
        %254 = vmatpush1.msra.mxu0 %v195
        %255 = vmatprep.subr.mxu0 %v194
        %256 = vmatpush1.msra.mxu0 %v193
        %257 = vmatprep.subr.mxu0 %v192
        %258 = vmatpush1.msra.mxu0 %v191
        %259 = vmatprep.subr.mxu0 %v190
        %260 = vmatpush1.msra.mxu0 %v189
        %261 = vmatprep.subr.mxu0 %v188
        %262 = vmatpush1.msra.mxu0 %v187
        %263 = vmatprep.subr.mxu0 %v186
        %264 = vmatpush1.msra.mxu0 %v185
        %265 = vmatprep.subr.mxu0 %v184
        %266 = vmatpush1.msra.mxu0 %v183
        %267 = vmatprep.subr.mxu0 %v182
        %268 = vmatpush1.msra.mxu0 %v181
        %269 = vmatprep.subr.mxu0 %v180
        %270 = vmatpush1.msra.mxu0 %v179
        %271 = vmatprep.subr.mxu0 %v178
        %272 = vmatpush1.msra.mxu0 %v177
        %273 = vmatprep.subr.mxu0 %v240
        %274 = vmatpush2.msra.mxu0 %v239
        %275 = vmatprep.subr.mxu0 %v238
        %276 = vmatpush2.msra.mxu0 %v237
        %277 = vmatprep.subr.mxu0 %v236
        %278 = vmatpush2.msra.mxu0 %v235
        %279 = vmatprep.subr.mxu0 %v234
        %280 = vmatpush2.msra.mxu0 %v233
        %281 = vmatprep.subr.mxu0 %v232
        %282 = vmatpush2.msra.mxu0 %v231
        %283 = vmatprep.subr.mxu0 %v230
        %284 = vmatpush2.msra.mxu0 %v229
        %285 = vmatprep.subr.mxu0 %v228
        %286 = vmatpush2.msra.mxu0 %v227
        %287 = vmatprep.subr.mxu0 %v226
        %288 = vmatpush2.msra.mxu0 %v225
        %289 = vmatprep.subr.mxu0 %v224
        %290 = vmatpush2.msra.mxu0 %v223
        %291 = vmatprep.subr.mxu0 %v222
        %292 = vmatpush2.msra.mxu0 %v221
        %293 = vmatprep.subr.mxu0 %v220
        %294 = vmatpush2.msra.mxu0 %v219
        %295 = vmatprep.subr.mxu0 %v218
        %296 = vmatpush2.msra.mxu0 %v217
        %297 = vmatprep.subr.mxu0 %v216
        %298 = vmatpush2.msra.mxu0 %v215
        %299 = vmatprep.subr.mxu0 %v214
        %300 = vmatpush2.msra.mxu0 %v213
        %301 = vmatprep.subr.mxu0 %v212
        %302 = vmatpush2.msra.mxu0 %v211
        %303 = vmatprep.subr.mxu0 %v210
        %304 = vmatpush2.msra.mxu0 %v209
        %305 = vmatprep.mubr.f32.mxu0 %v176
        %306 = vmatmul.mubr.f32.gmra.mxu0 %v175
        %v307 = vpop.f32.mrf.mxu0
        %v308 = vadd.f32 0.0, %v307
        %v309 = vpop.f32.mrf.mxu0
        %v310 = vadd.f32 0.0, %v309
        %311 = vdwg.mxu0
        %v312 = vlaneseq
        %v313 = vshrl.u32 %v312, 7
        %vm314 = vcmp.lt.s32.totalorder %v313, 0
        %v315 = vsub.s32 0, %v313
        %v316 = vsel %vm314, %v315, %v313
        %v317 = vshrl.u32 %v316, 3
        %v318 = vand.u32 %v316, 7
        %v319 = vsub.s32 0, %v318
        %v320 = vsel %vm314, %v319, %v318
        %vm321 = vcmp.ne.s32.totalorder %v320, 0
        %vm322 = vcmp.lt.s32.totalorder %v320, 0
        %vm323 = vmand %vm322, %vm321
        %v324 = vadd.s32 %v320, 8
        %v325 = vsel %vm323, %v324, %v320
        %v326 = vmul.f32 %v308, 0.5642099
        %v327 = vmul.f32 %v310, 0.5642099
        %v328 = vrot.slane %v308, 6
        %v329 = vrot.slane %v310, 6
        %vm330 = vcmp.ge.s32.totalorder %v325, 2
        %v331 = vsel %vm330, 0.010333864, 0.0
        %v332 = vmul.f32 %v328, %v331
        %v333 = vmul.f32 %v329, %v331
        %v334 = vadd.f32 %v326, %v332
        %v335 = vadd.f32 %v327, %v333
        %v336 = vrot.slane %v308, 7
        %v337 = vrot.slane %v310, 7
        %vm338 = vcmp.ge.s32.totalorder %v325, 1
        %v339 = vsel %vm338, 0.20756121, 0.0
        %v340 = vmul.f32 %v336, %v339
        %v341 = vmul.f32 %v337, %v339
        %v342 = vadd.f32 %v334, %v340
        %v343 = vadd.f32 %v335, %v341
        %v344 = vrot.slane %v308, 1
        %v345 = vrot.slane %v310, 1
        %vm346 = vcmp.lt.s32.totalorder %v325, 7
        %v347 = vsel %vm346, 0.20756121, 0.0
        %v348 = vmul.f32 %v344, %v347
        %v349 = vmul.f32 %v345, %v347
        %v350 = vadd.f32 %v342, %v348
        %v351 = vadd.f32 %v343, %v349
        %v352 = vrot.slane %v308, 2
        %v353 = vrot.slane %v310, 2
        %vm354 = vcmp.lt.s32.totalorder %v325, 6
        %v355 = vsel %vm354, 0.010333864, 0.0
        %v356 = vmul.f32 %v352, %v355
        %v357 = vmul.f32 %v353, %v355
        %v358 = vadd.f32 %v350, %v356
        %v359 = vadd.f32 %v351, %v357
        %360 = vst [vmem:[%s174] sm:$0xff] %v358
        %361 = vst [vmem:[%s174 + $0x8] sm:$0xff] %v359
        %s362 = sand.u32 %s75, 1
        %s363 = scalar_lea.sflag [#allocation4], %s362
        %s364 = sand.u32 %s75, 1
        %s365 = smul.addr %s364, 16
        %s366 = scalar_lea.vmem [#allocation7], %s365
        // Predicated region
        $region37: #{tpu_custom_call.1} parent=27 // pred_check
          %p367 = pneg %p85
        $region38: #{tpu_custom_call.1} parent=27 // pred_check_branch
          %369 = sbr.rel (%p367) target = $region40
        $region39: #{tpu_custom_call.1} parent=27 // pred_region
          %s371 = ssub.s32 256, 256
          %372 = vsyncadd %s363, %s371
          %s373 = smul.addr %s20, 2
          %s374 = smul.addr %s373, 128
          %s375 = scalar_lea.hbm %s2, %s374
          %s377 = sshll.u32 %s366, 4
          %s378 = int_to_ptr.vmem [resolvable:$true] %s377
          %380 = dma.vmem_to_hbm [thread:$0]  %s378, 256, %s375, %s363
        $region40: #{tpu_custom_call.1} parent=27 // pred_fallthru
          _
      $region28: #{tpu_custom_call.1} parent=5 // pred_fallthru
        _
      %p381 = scmp.le.s32.totalorder 2, %s15
      // Predicated region
      $region41: #{tpu_custom_call.1} parent=5 // pred_check
        %p382 = pneg %p381
      $region42: #{tpu_custom_call.1} parent=5 // pred_check_branch
        %384 = sbr.rel (%p382) target = $region44
      $region43: #{tpu_custom_call.1} parent=5 // pred_region
        %s385 = ssub.s32 %s15, 2
        // Predicated region
        $region45: #{tpu_custom_call.1} parent=43 // pred_check
          %p386 = pneg %p91
        $region46: #{tpu_custom_call.1} parent=43 // pred_check_branch
          %388 = sbr.rel (%p386) target = $region48
        $region47: #{tpu_custom_call.1} parent=43 // pred_region
          %s389 = sand.u32 %s76, 1
          %s390 = scalar_lea.sflag [#allocation4], %s389
          %s391 = sand.u32 %s76, 1
          %s392 = smul.addr %s391, 16
          %s393 = scalar_lea.vmem [#allocation7], %s392
          %394 = dma.done %s390, 256
        $region48: #{tpu_custom_call.1} parent=43 // pred_fallthru
          _
      $region44: #{tpu_custom_call.1} parent=5 // pred_fallthru
        _
    $region6: #{tpu_custom_call.1} parent=1 // loop_footer
      %s19 = sadd.s32 1, %s15
    $region7: #{tpu_custom_call.1} parent=1 // loop_footer_branch
      %14 = sbr.rel target = $region3
    $region8: #{tpu_custom_call.1} parent=1 // loop_exit
      _
    %395 = vsyncpa [#allocation3], 1
    %s396 = scalar_lea.sflag [#allocation3], 1
    %397 = vsyncpa %s396, 1
    %398 = vsyncpa [#allocation6], 1
    %399 = vsyncpa [#allocation4], 1
    %s400 = scalar_lea.sflag [#allocation4], 1
    %401 = vsyncpa %s400, 1

</llo_original>
